<compile_context>
chip_gen: v5e
topology: v5e:2x2
jax: 0.10.0
libtpu: 0.0.40
codegen_flags: <defaults>
</compile_context>

<pallas_src>
import functools
import math

import jax
import jax.numpy as jnp
from jax import lax
from jax.experimental import pallas as pl
from jax.experimental.pallas import tpu as pltpu

PATCH_SIZE = 7
DATA_DIM = PATCH_SIZE * PATCH_SIZE * 3   # 147
DIM_Q = 4


def self_attention_kernel(x_ref, w_ref, b_ref, o_ref, *, dq):
    # x_ref: (B, T, K)   w_ref: (K, 2*dq)   b_ref: (1, 2*dq)   o_ref: (B, T, T)
    B, T, K = x_ref.shape

    # Merge leading dims: layout no-op while T == 8 (== f32 sublane tile).
    # If T ever changes, reshape to (B*T, K) in the (jitted) wrapper instead.
    x2d = x_ref[...].reshape(B * T, K)

    # Fused Q/K projection: one MXU push over the whole batch.
    # 1/sqrt(K) is already folded into the q columns of w_ref / b_ref.
    qk = lax.dot_general(
        x2d, w_ref[...], (((1,), (0,)), ((), ())),
        preferred_element_type=jnp.float32,
    ) + b_ref[...]                                             # (B*T, 2*dq)

    q = qk[:, :dq]                                             # (B*T, dq), pre-scaled
    k = qk[:, dq:]                                             # (B*T, dq)

    # Statically unrolled per-batch logits, contracting the last dims
    # (no explicit transpose, no batched 3-D dot_general).
    for b in range(B):
        qb = q[b * T:(b + 1) * T, :]
        kb = k[b * T:(b + 1) * T, :]
        logits = lax.dot_general(
            qb, kb, (((1,), (1,)), ((), ())),
            preferred_element_type=jnp.float32,
        )                                                      # (T, T)
        o_ref[b] = logits.astype(o_ref.dtype)
    # TODO(synk): if T grows beyond toy size, emit the logits lane-dense
    # (last dim a multiple of 128) to avoid masked vst.msk partial stores.


def prepare_qk_params(wq, bq, wk, bk, data_dim):
    """One-time prep (call at init, NOT per forward): fuse Q/K params and fold
    the 1/sqrt(K) scale into the q columns."""
    scale = 1.0 / math.sqrt(data_dim)        # PyTorch divides by sqrt of the input dim
    w = jnp.concatenate([wq * scale, wk], axis=1)    # (K, 2*dq)
    b = jnp.concatenate([bq * scale, bk], axis=1)    # (1, 2*dq)
    return w, b


def self_attention(x, w_fused, b_fused):
    """x: (B, T, K) f32; w_fused: (K, 2*dq); b_fused: (1, 2*dq) -> (B, T, T).

    The wrapper is nothing but the pallas_call: no per-call concat / pad /
    scale ops (all hoisted into prepare_qk_params)."""
    B, T, K = x.shape
    dq = w_fused.shape[1] // 2

    kernel = functools.partial(self_attention_kernel, dq=dq)
    cost = pl.CostEstimate(
        flops=2 * B * T * K * (2 * dq) + 2 * B * T * T * dq,
        transcendentals=0,
        bytes_accessed=(x.size + w_fused.size + b_fused.size + B * T * T) * 4,
    )
    return pl.pallas_call(
        kernel,
        out_shape=jax.ShapeDtypeStruct((B, T, T), jnp.float32),
        in_specs=[
            pl.BlockSpec(memory_space=pltpu.MemorySpace.VMEM),   # x, whole array, single step
            pl.BlockSpec(memory_space=pltpu.MemorySpace.VMEM),   # fused W (scale pre-folded)
            pl.BlockSpec(memory_space=pltpu.MemorySpace.VMEM),   # fused bias
        ],
        out_specs=pl.BlockSpec(memory_space=pltpu.MemorySpace.VMEM),
        cost_estimate=cost,
    )(x, w_fused, b_fused)


def init_params(key, data_dim, dim_q):
    # Deterministic init mimicking nn.Linear's default U(-1/sqrt(fan_in), 1/sqrt(fan_in)).
    kq_w, kq_b, kk_w, kk_b = jax.random.split(key, 4)
    bound = 1.0 / jnp.sqrt(jnp.float32(data_dim))
    wq = jax.random.uniform(kq_w, (data_dim, dim_q), jnp.float32, -bound, bound)
    bq = jax.random.uniform(kq_b, (1, dim_q), jnp.float32, -bound, bound)
    wk = jax.random.uniform(kk_w, (data_dim, dim_q), jnp.float32, -bound, bound)
    bk = jax.random.uniform(kk_b, (1, dim_q), jnp.float32, -bound, bound)
    return wq, bq, wk, bk


def reference(x, wq, bq, wk, bk):
    q = jnp.einsum("btk,kd->btd", x, wq) + bq[0]
    k = jnp.einsum("btk,kd->btd", x, wk) + bk[0]
    dot = jnp.einsum("bqd,bkd->bqk", q, k)
    return dot / jnp.sqrt(jnp.float32(x.shape[-1]))


if __name__ == "__main__":
    key = jax.random.PRNGKey(0)
    k_x, k_p = jax.random.split(key)

    B, T, K = 2, 8, DATA_DIM
    x = jax.random.normal(k_x, (B, T, K), jnp.float32)
    wq, bq, wk, bk = init_params(k_p, K, DIM_Q)

    # One-time parameter fusion (outside the per-call hot path).
    w_fused, b_fused = prepare_qk_params(wq, bq, wk, bk, K)
    w_fused, b_fused = jax.block_until_ready((w_fused, b_fused))

    out = self_attention(x, w_fused, b_fused)
    out = jax.block_until_ready(out)

    ref = reference(x, wq, bq, wk, bk)
    assert out.shape == (B, T, T)
    assert jnp.allclose(out, ref, atol=1e-4, rtol=1e-4)

    print("KERNEL_OK")
</pallas_src>

<mosaic_0001>
module attributes {stable_mosaic.version = 11 : i64} {
  func.func @self_attention_kernel(%arg0: memref<2x8x147xf32, #tpu.memory_space<vmem>>, %arg1: memref<147x8xf32, #tpu.memory_space<vmem>>, %arg2: memref<1x8xf32, #tpu.memory_space<vmem>>, %arg3: memref<2x8x8xf32, #tpu.memory_space<vmem>>) attributes {dimension_semantics = [], scalar_prefetch = 0 : i64, scratch_operands = 0 : i64, tpu.core_type = #tpu.core_type<tc>} {
    %c0 = arith.constant 0 : index
    %c0_0 = arith.constant 0 : index
    %c0_1 = arith.constant 0 : index
    %0 = vector.load %arg0[%c0, %c0_0, %c0_1] : memref<2x8x147xf32, #tpu.memory_space<vmem>>, vector<2x8x147xf32>
    %1 = vector.shape_cast %0 : vector<2x8x147xf32> to vector<16x147xf32>
    %c0_2 = arith.constant 0 : index
    %c0_3 = arith.constant 0 : index
    %2 = vector.load %arg1[%c0_2, %c0_3] : memref<147x8xf32, #tpu.memory_space<vmem>>, vector<147x8xf32>
    %cst = arith.constant dense<0.000000e+00> : vector<16x8xf32>
    %3 = tpu.matmul %1, %2, %cst {dimension_numbers = #tpu.dot_dimension_numbers<[1], [0], [0], [1], [0, 0, 1, 1], [], []>} : vector<16x147xf32>, vector<147x8xf32>, vector<16x8xf32> -> vector<16x8xf32>
    %c0_4 = arith.constant 0 : index
    %c0_5 = arith.constant 0 : index
    %4 = vector.load %arg2[%c0_4, %c0_5] : memref<1x8xf32, #tpu.memory_space<vmem>>, vector<1x8xf32>
    %5 = vector.broadcast %4 : vector<1x8xf32> to vector<16x8xf32>
    %6 = arith.addf %3, %5 : vector<16x8xf32>
    %7 = vector.extract_strided_slice %6 {offsets = [0, 0], sizes = [16, 4], strides = [1, 1]} : vector<16x8xf32> to vector<16x4xf32>
    %8 = vector.extract_strided_slice %6 {offsets = [0, 4], sizes = [16, 4], strides = [1, 1]} : vector<16x8xf32> to vector<16x4xf32>
    %9 = vector.extract_strided_slice %7 {offsets = [0, 0], sizes = [8, 4], strides = [1, 1]} : vector<16x4xf32> to vector<8x4xf32>
    %10 = vector.extract_strided_slice %8 {offsets = [0, 0], sizes = [8, 4], strides = [1, 1]} : vector<16x4xf32> to vector<8x4xf32>
    %cst_6 = arith.constant dense<0.000000e+00> : vector<8x8xf32>
    %11 = tpu.matmul %9, %10, %cst_6 {dimension_numbers = #tpu.dot_dimension_numbers<[1], [1], [0], [0], [0, 0, 1, 0], [], []>} : vector<8x4xf32>, vector<8x4xf32>, vector<8x8xf32> -> vector<8x8xf32>
    %c0_7 = arith.constant 0 : index
    %c0_8 = arith.constant 0 : index
    %c0_9 = arith.constant 0 : index
    %12 = vector.load %arg3[%c0_7, %c0_8, %c0_9] : memref<2x8x8xf32, #tpu.memory_space<vmem>>, vector<1x8x8xf32>
    %13 = vector.shape_cast %12 : vector<1x8x8xf32> to vector<8x8xf32>
    %14 = vector.shape_cast %11 : vector<8x8xf32> to vector<1x8x8xf32>
    tpu.vector_store %arg3[%c0_7, %c0_8, %c0_9], %14 {strides = array<i32>} : memref<2x8x8xf32, #tpu.memory_space<vmem>>, vector<1x8x8xf32>,
    %15 = vector.extract_strided_slice %7 {offsets = [8, 0], sizes = [8, 4], strides = [1, 1]} : vector<16x4xf32> to vector<8x4xf32>
    %16 = vector.extract_strided_slice %8 {offsets = [8, 0], sizes = [8, 4], strides = [1, 1]} : vector<16x4xf32> to vector<8x4xf32>
    %cst_10 = arith.constant dense<0.000000e+00> : vector<8x8xf32>
    %17 = tpu.matmul %15, %16, %cst_10 {dimension_numbers = #tpu.dot_dimension_numbers<[1], [1], [0], [0], [0, 0, 1, 0], [], []>} : vector<8x4xf32>, vector<8x4xf32>, vector<8x8xf32> -> vector<8x8xf32>
    %c1 = arith.constant 1 : index
    %c0_11 = arith.constant 0 : index
    %c0_12 = arith.constant 0 : index
    %18 = vector.load %arg3[%c1, %c0_11, %c0_12] : memref<2x8x8xf32, #tpu.memory_space<vmem>>, vector<1x8x8xf32>
    %19 = vector.shape_cast %18 : vector<1x8x8xf32> to vector<8x8xf32>
    %20 = vector.shape_cast %17 : vector<8x8xf32> to vector<1x8x8xf32>
    tpu.vector_store %arg3[%c1, %c0_11, %c0_12], %20 {strides = array<i32>} : memref<2x8x8xf32, #tpu.memory_space<vmem>>, vector<1x8x8xf32>,
    return
  }
}

</mosaic_0001>

<llo_original>
// kernel: tpu_custom_call.1
$region0: #{tpu_custom_call.1}
  #allocation0 [shape = 'u32[]', space=smem, size = 0x4, offset = 0x4, fixed_abs, tag = 'smem constant byte address 0x4 - core index']
  #allocation1 [shape = 'u32[72,128]{1,0:T(1,128)}', space=vmem, size = 0x9000, scoped, tag = 'internal scratch']
  %s0 = inlined_call_operand.vmem [shape: f32[2,8,147], index: 0, kind: input, shape index: {}]
  %s1 = inlined_call_operand.vmem [shape: f32[147,8], index: 1, kind: input, shape index: {}]
  %s2 = inlined_call_operand.vmem [shape: f32[1,8], index: 2, kind: input, shape index: {}]
  %s3 = inlined_call_operand.hbm [shape: f32[2,8,8], index: 3, kind: output, shape index: {}]
  %s4 = sld [smem:[#allocation0]]
  $region22: #{tpu_custom_call.1} parent=0
    _
  %s6 = ssub.s32 1, %s4
  %s7 = scalar_select 0, %s6, %s4
  $region1: #{tpu_custom_call.1} parent=0
    #allocation2 [shape = 'u8[8192]{0}', space=vmem, size = 0x2000, scoped, tag = 'output window, operand 0, single buffered']
    #allocation3 [shape = 's32[1]{0}', space=sflag, size = 0x4, scoped, tag = 'scoped memory for tpu_custom_call.1']
    %8 = vsyncpa [#allocation3], 0
    // Predicated region
    $region2: #{tpu_custom_call.1} parent=1 // pred_check
      _
    $region3: #{tpu_custom_call.1} parent=1 // pred_check_branch
      %10 = sbr.rel (0) target = $region5
    $region4: #{tpu_custom_call.1} parent=1 // pred_region
      _
    $region5: #{tpu_custom_call.1} parent=1 // pred_fallthru
      _
    // Predicated region
    $region6: #{tpu_custom_call.1} parent=1 // pred_check
      _
    $region7: #{tpu_custom_call.1} parent=1 // pred_check_branch
      %12 = sbr.rel (0) target = $region9
    $region8: #{tpu_custom_call.1} parent=1 // pred_region
      _
    $region9: #{tpu_custom_call.1} parent=1 // pred_fallthru
      _
    // Predicated region
    $region10: #{tpu_custom_call.1} parent=1 // pred_check
      _
    $region11: #{tpu_custom_call.1} parent=1 // pred_check_branch
      %14 = sbr.rel (0) target = $region13
    $region12: #{tpu_custom_call.1} parent=1 // pred_region
      _
    $region13: #{tpu_custom_call.1} parent=1 // pred_fallthru
      _
    %v15 = vld [vmem:[%s0] sm:$0xff]
    %v16 = vld [vmem:[%s0 + $0x8] sm:$0xff]
    %v17 = vld [vmem:[%s0 + $0x10] sm:$0xff]
    %v18 = vld [vmem:[%s0 + $0x18] sm:$0xff]
    %v19 = vld [vmem:[%s1] sm:$0xff]
    %v20 = vld [vmem:[%s1 + $0x8] sm:$0xff]
    %v21 = vld [vmem:[%s1 + $0x10] sm:$0xff]
    %v22 = vld [vmem:[%s1 + $0x18] sm:$0xff]
    %v23 = vld [vmem:[%s1 + $0x20] sm:$0xff]
    %v24 = vld [vmem:[%s1 + $0x28] sm:$0xff]
    %v25 = vld [vmem:[%s1 + $0x30] sm:$0xff]
    %v26 = vld [vmem:[%s1 + $0x38] sm:$0xff]
    %v27 = vld [vmem:[%s1 + $0x40] sm:$0xff]
    %v28 = vld [vmem:[%s1 + $0x48] sm:$0xff]
    %v29 = vld [vmem:[%s1 + $0x50] sm:$0xff]
    %v30 = vld [vmem:[%s1 + $0x58] sm:$0xff]
    %v31 = vld [vmem:[%s1 + $0x60] sm:$0xff]
    %v32 = vld [vmem:[%s1 + $0x68] sm:$0xff]
    %v33 = vld [vmem:[%s1 + $0x70] sm:$0xff]
    %v34 = vld [vmem:[%s1 + $0x78] sm:$0xff]
    %v35 = vld [vmem:[%s1 + $0x80] sm:$0xff]
    %v36 = vld [vmem:[%s1 + $0x88] sm:$0xff]
    %v37 = vld [vmem:[%s1 + $0x90] sm:$0x7]
    %v38 = vld [vmem:[%s2] sm:$0x1]
    %v40 = vperm.slane %v38, 0
    %vm42 = vcmask 154624
    %v44 = vsel %vm42, %v16, 0
    %v47 = vsel %vm42, %v18, 0
    %vm49 = vcmask 1042432
    %v51 = vsel %vm49, %v37, 0
    %53 = vmatpush.msra.mxu0 %v34
    %54 = vmatpush.msra.mxu0 %v33
    %55 = vmatpush.msra.mxu0 %v32
    %56 = vmatpush.msra.mxu0 %v31
    %57 = vmatpush.msra.mxu0 %v30
    %58 = vmatpush.msra.mxu0 %v29
    %59 = vmatpush.msra.mxu0 %v28
    %60 = vmatpush.msra.mxu0 %v27
    %61 = vmatpush.msra.mxu0 %v26
    %62 = vmatpush.msra.mxu0 %v25
    %63 = vmatpush.msra.mxu0 %v24
    %64 = vmatpush.msra.mxu0 %v23
    %65 = vmatpush.msra.mxu0 %v22
    %66 = vmatpush.msra.mxu0 %v21
    %67 = vmatpush.msra.mxu0 %v20
    %68 = vmatpush.msra.mxu0 %v19
    %69 = vmatmul.f32.gmra.mxu0 %v15
    %v70 = vpop.f32.mrf.mxu0
    %v71 = vadd.f32 %v40, %v70
    %72 = vmatmul.f32.gmra.mxu0 %v17
    %v73 = vpop.f32.mrf.mxu0
    %v74 = vadd.f32 %v40, %v73
    %75 = vdwg.mxu0
    %76 = vmatpush.msra.mxu0 0.0
    %77 = vmatpush.msra.mxu0 0.0
    %78 = vmatpush.msra.mxu0 0.0
    %79 = vmatpush.msra.mxu0 0.0
    %80 = vmatpush.msra.mxu0 0.0
    %81 = vmatpush.msra.mxu0 0.0
    %82 = vmatpush.msra.mxu0 0.0
    %83 = vmatpush.msra.mxu0 0.0
    %84 = vmatpush.msra.mxu0 0.0
    %85 = vmatpush.msra.mxu0 0.0
    %86 = vmatpush.msra.mxu0 0.0
    %87 = vmatpush.msra.mxu0 0.0
    %88 = vmatpush.msra.mxu0 0.0
    %89 = vmatpush.msra.mxu0 %v51
    %90 = vmatpush.msra.mxu0 %v36
    %91 = vmatpush.msra.mxu0 %v35
    %92 = vmatmul.f32.gmra.mxu0 %v44
    %v93 = vpop.f32.mrf.mxu0
    %v94 = vadd.f32 %v71, %v93
    %95 = vmatmul.f32.gmra.mxu0 %v47
    %v96 = vpop.f32.mrf.mxu0
    %v97 = vadd.f32 %v74, %v96
    %98 = vdwg.mxu0
    %100 = vrot.lane.b32.xlu0 %v94, 124
    %v101 = vpop.permute.xlu0 %100
    %vm102 = vcmask 31744
    %v103 = vsel %vm102, %v94, 0
    %v105 = vsel %vm102, %v101, 0
    %107 = vmatpush.xpose.msra.mxu0 0.0
    %108 = vmatpush.xpose.msra.mxu0 0.0
    %109 = vmatpush.xpose.msra.mxu0 0.0
    %110 = vmatpush.xpose.msra.mxu0 0.0
    %111 = vmatpush.xpose.msra.mxu0 0.0
    %112 = vmatpush.xpose.msra.mxu0 0.0
    %113 = vmatpush.xpose.msra.mxu0 0.0
    %114 = vmatpush.xpose.msra.mxu0 0.0
    %115 = vmatpush.xpose.msra.mxu0 0.0
    %116 = vmatpush.xpose.msra.mxu0 0.0
    %117 = vmatpush.xpose.msra.mxu0 0.0
    %118 = vmatpush.xpose.msra.mxu0 0.0
    %119 = vmatpush.xpose.msra.mxu0 0.0
    %120 = vmatpush.xpose.msra.mxu0 0.0
    %121 = vmatpush.xpose.msra.mxu0 0.0
    %122 = vmatpush.xpose.msra.mxu0 %v105
    %123 = vmatmul.f32.gmra.mxu0 %v103
    %v124 = vpop.f32.mrf.mxu0
    %v125 = vadd.f32 0.0, %v124
    %126 = vdwg.mxu0
    %vm127 = vcmask 64512
    %128 = vst.msk [vmem:[#allocation2] sm:$0xff] %vm127, %v125
    %130 = vrot.lane.b32.xlu0 %v97, 124
    %v131 = vpop.permute.xlu0 %130
    %v132 = vsel %vm102, %v97, 0
    %v134 = vsel %vm102, %v131, 0
    %136 = vmatpush.xpose.msra.mxu0 0.0
    %137 = vmatpush.xpose.msra.mxu0 0.0
    %138 = vmatpush.xpose.msra.mxu0 0.0
    %139 = vmatpush.xpose.msra.mxu0 0.0
    %140 = vmatpush.xpose.msra.mxu0 0.0
    %141 = vmatpush.xpose.msra.mxu0 0.0
    %142 = vmatpush.xpose.msra.mxu0 0.0
    %143 = vmatpush.xpose.msra.mxu0 0.0
    %144 = vmatpush.xpose.msra.mxu0 0.0
    %145 = vmatpush.xpose.msra.mxu0 0.0
    %146 = vmatpush.xpose.msra.mxu0 0.0
    %147 = vmatpush.xpose.msra.mxu0 0.0
    %148 = vmatpush.xpose.msra.mxu0 0.0
    %149 = vmatpush.xpose.msra.mxu0 0.0
    %150 = vmatpush.xpose.msra.mxu0 0.0
    %151 = vmatpush.xpose.msra.mxu0 %v134
    %152 = vmatmul.f32.gmra.mxu0 %v132
    %v153 = vpop.f32.mrf.mxu0
    %v154 = vadd.f32 0.0, %v153
    %155 = vdwg.mxu0
    %s156 = scalar_lea.vmem [#allocation2], 8
    %157 = vst.msk [vmem:[%s156] sm:$0xff] %vm127, %v154
    // Predicated region
    $region14: #{tpu_custom_call.1} parent=1 // pred_check
      _
    $region15: #{tpu_custom_call.1} parent=1 // pred_check_branch
      %159 = sbr.rel (0) target = $region17
    $region16: #{tpu_custom_call.1} parent=1 // pred_region
      %161 = vsyncadd [#allocation3], 0
      %s162 = sshll.u32 [#allocation2], 4
      %s163 = int_to_ptr.vmem [resolvable:$true] %s162
      %s164 = sshll.u32 %s3, 4
      %s165 = int_to_ptr.hbm [resolvable:$true] %s164
      %170 = dma.vmem_to_hbm [thread:$0]  %s163, 256, %s165, [#allocation3], 128, 128, 8
    $region17: #{tpu_custom_call.1} parent=1 // pred_fallthru
      _
    // Predicated region
    $region18: #{tpu_custom_call.1} parent=1 // pred_check
      _
    $region19: #{tpu_custom_call.1} parent=1 // pred_check_branch
      %172 = sbr.rel (0) target = $region21
    $region20: #{tpu_custom_call.1} parent=1 // pred_region
      %174 = dma.done [#allocation3], 256
    $region21: #{tpu_custom_call.1} parent=1 // pred_fallthru
      _
    %175 = vsyncpa [#allocation3], 1

</llo_original>
